<compile_context>
chip_gen: v7x
topology: tpu7x:2x2x1
jax: 0.10.0
libtpu: 0.0.40
codegen_flags: <defaults>
</compile_context>

<pallas_src>
import numpy as np
import jax
import jax.numpy as jnp
from jax.experimental import pallas as pl
from jax.experimental.pallas import tpu as pltpu


def _round_up(x: int, m: int) -> int:
    return ((x + m - 1) // m) * m


def _vmem_capacity_bytes() -> int:
    try:
        return int(pltpu.get_tpu_info().vmem_capacity_bytes)
    except Exception:
        return 64 * 1024 * 1024  # conservative (v7x-sized) fallback


def _make_kernel(margin: float, t_tile: int, multi_d: bool):
    """Kernel factory. multi_d=True adds the D-axis partial-sum accumulator."""

    def _sq_partial(tri_ref, emb_ref):
        # tri_ref: [t_tile, 3] int32, emb_ref: [n_pad, d_tile] (matmul dtype).
        tri = tri_ref[...]
        emb = emb_ref[...]
        n_rows = emb.shape[0]

        ia = tri[:, 0:1]
        anchor2 = jnp.concatenate([ia, ia], axis=0)                   # [2T, 1]
        other2 = jnp.concatenate([tri[:, 1:2], tri[:, 2:3]], axis=0)  # [2T, 1]

        # {-1,0,+1} difference-selection matrix, built in int32 (cheap on v5e's
        # VPU), single cast to the MXU operand dtype, one fused gather matmul.
        col = jax.lax.broadcasted_iota(jnp.int32, (2 * t_tile, n_rows), 1)
        sel = ((anchor2 == col).astype(jnp.int32)
               - (other2 == col).astype(jnp.int32)).astype(emb.dtype)

        diff = jnp.dot(sel, emb, preferred_element_type=jnp.float32)  # [2T, d_tile]
        return jnp.sum(diff * diff, axis=1, keepdims=True)            # [2T, 1]

    def _finalize(sq, cnt, i, out_ref):
        ap = jnp.sqrt(sq[:t_tile, :])                                 # [T, 1]
        an = jnp.sqrt(sq[t_tile:, :])
        losses = jnp.maximum(ap - an + margin, 0.0)

        # Mask padded triplets (global row index >= valid count).
        rows = jax.lax.broadcasted_iota(jnp.int32, (t_tile, 1), 0) + i * t_tile
        mask = (rows < cnt).astype(jnp.float32)

        s_loss = jnp.sum(losses * mask, axis=0, keepdims=True)        # (1, 1)
        s_ap = jnp.sum(ap * mask, axis=0, keepdims=True)
        s_an = jnp.sum(an * mask, axis=0, keepdims=True)

        # Lane-dense (8, 128) output block: lanes 0/1/2 carry the partial sums.
        lane = jax.lax.broadcasted_iota(jnp.int32, out_ref.shape, 1)
        out_ref[...] = (jnp.where(lane == 0, s_loss, 0.0)
                        + jnp.where(lane == 1, s_ap, 0.0)
                        + jnp.where(lane == 2, s_an, 0.0))

    if multi_d:
        def kernel(cnt_ref, emb_ref, tri_ref, out_ref, sq_acc):
            i = pl.program_id(0)
            dj = pl.program_id(1)

            @pl.when(dj == 0)
            def _():
                sq_acc[...] = jnp.zeros_like(sq_acc)

            sq_acc[...] += _sq_partial(tri_ref, emb_ref)

            @pl.when(dj == pl.num_programs(1) - 1)
            def _():
                _finalize(sq_acc[...], cnt_ref[0], i, out_ref)
    else:
        def kernel(cnt_ref, emb_ref, tri_ref, out_ref):
            i = pl.program_id(0)
            _finalize(_sq_partial(tri_ref, emb_ref), cnt_ref[0], i, out_ref)

    return kernel


def online_triplet_loss(embeddings, triplets, margin, *,
                        matmul_dtype=None, t_tile_max=1024, d_tile=None):
    """embeddings: jnp [N, D] float32/bf16; triplets: np [T, 3] int32.

    Returns (loss_mean, num_triplets, ap_mean, an_mean), matching the PyTorch
    module's forward.
    """
    n, d = embeddings.shape

    if matmul_dtype is None:
        matmul_dtype = (jnp.bfloat16 if embeddings.dtype == jnp.float32
                        else embeddings.dtype)
    matmul_dtype = jnp.dtype(matmul_dtype)
    itemsize = matmul_dtype.itemsize

    # Per-generation budgets: v5e/v6e have 128 MiB VMEM, v7x has 64 MiB per TC.
    vmem_phys = _vmem_capacity_bytes()
    if vmem_phys >= 96 * 1024 * 1024:
        vmem_limit = 80 * 1024 * 1024
        t_tile_hw_cap = 2048
    else:
        vmem_limit = 44 * 1024 * 1024
        t_tile_hw_cap = 1024

    # Pad N to the compute dtype's sublane tile, D to the 128-lane tile.
    sub = 16 if itemsize == 2 else 8
    n_pad = _round_up(max(n, sub), sub)
    d_pad = _round_up(max(d, 1), 128)

    # D tile: keep the embedding block within ~1/3 of the VMEM budget.
    if d_tile is None:
        max_emb_bytes = vmem_limit // 3
        d_tile = ((max_emb_bytes // (n_pad * itemsize)) // 128) * 128
        d_tile = int(min(d_pad, max(128, d_tile)))
    else:
        d_tile = int(min(_round_up(int(d_tile), 128), d_pad))
    d_pad = _round_up(d_pad, d_tile)
    nd = d_pad // d_tile

    emb_p = jnp.pad(embeddings.astype(matmul_dtype),
                    ((0, n_pad - n), (0, d_pad - d)))

    # T tile: big tiles amortize per-step overhead; bound by the VMEM needed by
    # the in-kernel [2*t_tile, n_pad] selection and [2*t_tile, d_tile] product.
    t = int(triplets.shape[0])
    per_row_bytes = n_pad * (4 + itemsize) + d_tile * 4
    max_rows = max(8, (vmem_limit // 3) // (2 * per_row_bytes))
    t_tile = max(8, min(t_tile_hw_cap, int(t_tile_max), (max_rows // 8) * 8,
                        _round_up(max(t, 1), 8)))
    if t_tile >= 256:
        t_tile = (t_tile // 128) * 128        # keep the MXU M dimension full
    t_pad = _round_up(max(t, 1), t_tile)
    nt = t_pad // t_tile

    tri_np = np.zeros((t_pad, 3), dtype=np.int32)
    if t:
        tri_np[:t] = np.asarray(triplets, np.int32)
    tri = jnp.asarray(tri_np)
    count = jnp.asarray([t], dtype=jnp.int32)     # scalar-prefetch -> SMEM

    def _call(single_buffer_emb: bool):
        emb_kwargs = {}
        if single_buffer_emb:
            # Resident embedding block (constant index_map): double-buffering
            # it is pure VMEM waste.
            emb_kwargs["pipeline_mode"] = pl.Buffered(1)
        grid_spec = pltpu.PrefetchScalarGridSpec(
            num_scalar_prefetch=1,
            grid=(nt, nd),
            in_specs=[
                pl.BlockSpec((n_pad, d_tile), lambda i, dj, cnt: (0, dj),
                             **emb_kwargs),
                pl.BlockSpec((t_tile, 3), lambda i, dj, cnt: (i, 0)),
            ],
            out_specs=pl.BlockSpec((8, 128), lambda i, dj, cnt: (0, i)),
            scratch_shapes=([pltpu.VMEM((2 * t_tile, 1), jnp.float32)]
                            if nd > 1 else []),
        )
        return pl.pallas_call(
            _make_kernel(float(margin), t_tile, nd > 1),
            out_shape=jax.ShapeDtypeStruct((8, nt * 128), jnp.float32),
            grid_spec=grid_spec,
            compiler_params=pltpu.CompilerParams(
                dimension_semantics=("parallel", "arbitrary"),
                vmem_limit_bytes=vmem_limit,
            ),
        )(count, emb_p, tri)

    try:
        out = _call(single_buffer_emb=(nd == 1))
    except Exception:
        # Fallback if this jax build rejects pl.Buffered(1) on a resident block.
        out = _call(single_buffer_emb=False)

    per_tile = out[0].reshape(nt, 128)[:, :3]     # (nt, 3): sums per T tile
    sums = jnp.sum(per_tile, axis=0)
    inv = 1.0 / float(max(t, 1))
    return sums[0] * inv, t, sums[1] * inv, sums[2] * inv


def all_triplet_selector(labels):
    """Host-side glue: all valid (anchor, positive, negative) triplets."""
    labels = np.asarray(labels)
    n = labels.shape[0]
    trips = []
    for a in range(n):
        for p in range(n):
            if p == a or labels[p] != labels[a]:
                continue
            for neg in range(n):
                if labels[neg] != labels[a]:
                    trips.append((a, p, neg))
    return np.asarray(trips, dtype=np.int32)


def _reference(e_np, trips, margin):
    a, p, ng = e_np[trips[:, 0]], e_np[trips[:, 1]], e_np[trips[:, 2]]
    ap = np.sqrt(((a - p) ** 2).sum(1))
    an = np.sqrt(((a - ng) ** 2).sum(1))
    loss = np.maximum(ap - an + margin, 0.0)
    return loss.mean(), ap.mean(), an.mean()


if __name__ == "__main__":
    margin = 1.0
    key = jax.random.PRNGKey(0)

    # ---- Case 1: small shapes, default config (bf16 MXU operands) ----
    N, D = 8, 32
    emb = jax.random.normal(key, (N, D), dtype=jnp.float32)
    target = np.array([0, 0, 1, 1, 2, 2, 3, 3], dtype=np.int32)
    trips = all_triplet_selector(target)                      # [48, 3]

    loss_m, n_trip, ap_m, an_m = online_triplet_loss(emb, trips, margin)
    jax.block_until_ready((loss_m, ap_m, an_m))
    assert n_trip == len(trips)

    e_f32 = np.asarray(emb)
    e_bf16 = np.asarray(emb.astype(jnp.bfloat16).astype(jnp.float32))
    l_b, ap_b, an_b = _reference(e_bf16, trips, margin)        # kernel operands
    l_f, ap_f, an_f = _reference(e_f32, trips, margin)         # exact f32
    assert np.allclose(float(loss_m), l_b, atol=1e-3)
    assert np.allclose(float(ap_m), ap_b, atol=1e-3)
    assert np.allclose(float(an_m), an_b, atol=1e-3)
    assert np.allclose(float(loss_m), l_f, atol=1e-1)          # bf16 cast error

    # ---- Case 2: exact float32 matmul path ----
    loss2, _, ap2, an2 = online_triplet_loss(
        emb, trips, margin, matmul_dtype=jnp.float32)
    jax.block_until_ready((loss2, ap2, an2))
    assert np.allclose(float(loss2), l_f, atol=1e-4)
    assert np.allclose(float(ap2), ap_f, atol=1e-4)
    assert np.allclose(float(an2), an_f, atol=1e-4)

    # ---- Case 3: exercise D tiling (nd > 1), multiple T tiles and masking ----
    N3, D3 = 12, 256
    emb3 = jax.random.normal(jax.random.PRNGKey(1), (N3, D3), dtype=jnp.float32)
    target3 = np.array([0, 0, 0, 1, 1, 1, 2, 2, 2, 3, 3, 3], dtype=np.int32)
    trips3 = all_triplet_selector(target3)                     # [216, 3]
    loss3, n3, ap3, an3 = online_triplet_loss(
        emb3, trips3, margin, matmul_dtype=jnp.float32,
        t_tile_max=32, d_tile=128)
    jax.block_until_ready((loss3, ap3, an3))
    l3, ap_r3, an_r3 = _reference(np.asarray(emb3), trips3, margin)
    assert n3 == len(trips3)
    assert np.allclose(float(loss3), l3, atol=1e-4)
    assert np.allclose(float(ap3), ap_r3, atol=1e-4)
    assert np.allclose(float(an3), an_r3, atol=1e-4)

    print("KERNEL_OK")
</pallas_src>

<mosaic_0001>
module attributes {stable_mosaic.version = 11 : i64} {
  func.func @kernel(%arg0: i32, %arg1: i32, %arg2: memref<1xi32, #tpu.memory_space<smem>>, %arg3: memref<16x128xbf16, #tpu.memory_space<vmem>>, %arg4: memref<48x3xi32, #tpu.memory_space<vmem>>, %arg5: memref<8x128xf32, #tpu.memory_space<vmem>>) attributes {dimension_semantics = [#tpu.dimension_semantics<parallel>, #tpu.dimension_semantics<arbitrary>], iteration_bounds = array<i64: 1, 1>, scalar_prefetch = 1 : i64, scratch_operands = 0 : i64, tpu.core_type = #tpu.core_type<tc>, window_params = [{pipeline_mode = #tpu.pipeline_mode<synchronous>, transform_indices = @transform_0, window_bounds = array<i64: 16, 128>}, {transform_indices = @transform_1, window_bounds = array<i64: 48, 3>}, {transform_indices = @transform_2, window_bounds = array<i64: 8, 128>}]} {
    %c0 = arith.constant 0 : index
    %c0_0 = arith.constant 0 : index
    %0 = vector.load %arg4[%c0, %c0_0] : memref<48x3xi32, #tpu.memory_space<vmem>>, vector<48x3xi32>
    %c0_1 = arith.constant 0 : index
    %c0_2 = arith.constant 0 : index
    %1 = vector.load %arg3[%c0_1, %c0_2] : memref<16x128xbf16, #tpu.memory_space<vmem>>, vector<16x128xbf16>
    %2 = vector.extract_strided_slice %0 {offsets = [0, 0], sizes = [48, 1], strides = [1, 1]} : vector<48x3xi32> to vector<48x1xi32>
    %3 = tpu.concatenate %2, %2 in 0 : vector<48x1xi32>, vector<48x1xi32> -> vector<96x1xi32>
    %4 = vector.extract_strided_slice %0 {offsets = [0, 1], sizes = [48, 1], strides = [1, 1]} : vector<48x3xi32> to vector<48x1xi32>
    %5 = vector.extract_strided_slice %0 {offsets = [0, 2], sizes = [48, 1], strides = [1, 1]} : vector<48x3xi32> to vector<48x1xi32>
    %6 = tpu.concatenate %4, %5 in 0 : vector<48x1xi32>, vector<48x1xi32> -> vector<96x1xi32>
    %7 = tpu.iota {dimensions = array<i32: 1>} : vector<96x16xi32>
    %8 = vector.broadcast %3 : vector<96x1xi32> to vector<96x16xi32>
    %9 = arith.cmpi eq, %8, %7 : vector<96x16xi32>
    %10 = arith.extui %9 : vector<96x16xi1> to vector<96x16xi32>
    %11 = vector.broadcast %6 : vector<96x1xi32> to vector<96x16xi32>
    %12 = arith.cmpi eq, %11, %7 : vector<96x16xi32>
    %13 = arith.extui %12 : vector<96x16xi1> to vector<96x16xi32>
    %14 = arith.subi %10, %13 : vector<96x16xi32>
    %15 = arith.sitofp %14 : vector<96x16xi32> to vector<96x16xbf16>
    %cst = arith.constant dense<0.000000e+00> : vector<96x128xf32>
    %16 = tpu.matmul %15, %1, %cst {dimension_numbers = #tpu.dot_dimension_numbers<[1], [0], [0], [1], [0, 0, 1, 1], [], []>} : vector<96x16xbf16>, vector<16x128xbf16>, vector<96x128xf32> -> vector<96x128xf32>
    %17 = arith.mulf %16, %16 : vector<96x128xf32>
    %cst_3 = arith.constant dense<0.000000e+00> : vector<96xf32>
    %18 = vector.multi_reduction <add>, %17, %cst_3 [1] : vector<96x128xf32> to vector<96xf32>
    %19 = vector.shape_cast %18 : vector<96xf32> to vector<96x1xf32>
    %c0_4 = arith.constant 0 : index
    %20 = memref.load %arg2[%c0_4] : memref<1xi32, #tpu.memory_space<smem>>
    %21 = vector.extract_strided_slice %19 {offsets = [0, 0], sizes = [48, 1], strides = [1, 1]} : vector<96x1xf32> to vector<48x1xf32>
    %22 = math.sqrt %21 : vector<48x1xf32>
    %23 = vector.extract_strided_slice %19 {offsets = [48, 0], sizes = [48, 1], strides = [1, 1]} : vector<96x1xf32> to vector<48x1xf32>
    %24 = math.sqrt %23 : vector<48x1xf32>
    %25 = arith.subf %22, %24 : vector<48x1xf32>
    %cst_5 = arith.constant 1.000000e+00 : f32
    %26 = vector.broadcast %cst_5 : f32 to vector<48x1xf32>
    %27 = arith.addf %25, %26 : vector<48x1xf32>
    %cst_6 = arith.constant 0.000000e+00 : f32
    %28 = vector.broadcast %cst_6 : f32 to vector<48x1xf32>
    %29 = arith.maximumf %27, %28 : vector<48x1xf32>
    %30 = tpu.iota {dimensions = array<i32: 0>} : vector<48x1xi32>
    %c48_i32 = arith.constant 48 : i32
    %31 = arith.muli %arg0, %c48_i32 : i32
    %32 = vector.broadcast %31 : i32 to vector<48x1xi32>
    %33 = arith.addi %30, %32 : vector<48x1xi32>
    %34 = vector.broadcast %20 : i32 to vector<48x1xi32>
    %35 = arith.cmpi slt, %33, %34 : vector<48x1xi32>
    %36 = arith.extui %35 : vector<48x1xi1> to vector<48x1xi32>
    %37 = arith.sitofp %36 : vector<48x1xi32> to vector<48x1xf32>
    %38 = arith.mulf %29, %37 : vector<48x1xf32>
    %cst_7 = arith.constant dense<0.000000e+00> : vector<1xf32>
    %39 = vector.multi_reduction <add>, %38, %cst_7 [0] : vector<48x1xf32> to vector<1xf32>
    %40 = vector.shape_cast %39 : vector<1xf32> to vector<1x1xf32>
    %41 = arith.mulf %22, %37 : vector<48x1xf32>
    %cst_8 = arith.constant dense<0.000000e+00> : vector<1xf32>
    %42 = vector.multi_reduction <add>, %41, %cst_8 [0] : vector<48x1xf32> to vector<1xf32>
    %43 = vector.shape_cast %42 : vector<1xf32> to vector<1x1xf32>
    %44 = arith.mulf %24, %37 : vector<48x1xf32>
    %cst_9 = arith.constant dense<0.000000e+00> : vector<1xf32>
    %45 = vector.multi_reduction <add>, %44, %cst_9 [0] : vector<48x1xf32> to vector<1xf32>
    %46 = vector.shape_cast %45 : vector<1xf32> to vector<1x1xf32>
    %47 = tpu.iota {dimensions = array<i32: 1>} : vector<8x128xi32>
    %c0_i32 = arith.constant 0 : i32
    %48 = vector.broadcast %c0_i32 : i32 to vector<8x128xi32>
    %49 = arith.cmpi eq, %47, %48 : vector<8x128xi32>
    %cst_10 = arith.constant 0.000000e+00 : f32
    %50 = vector.shape_cast %40 : vector<1x1xf32> to vector<1x1xf32>
    %51 = vector.broadcast %50 : vector<1x1xf32> to vector<8x128xf32>
    %52 = vector.broadcast %cst_10 : f32 to vector<8x128xf32>
    %53 = arith.select %49, %51, %52 : vector<8x128xi1>, vector<8x128xf32>
    %c1_i32 = arith.constant 1 : i32
    %54 = vector.broadcast %c1_i32 : i32 to vector<8x128xi32>
    %55 = arith.cmpi eq, %47, %54 : vector<8x128xi32>
    %cst_11 = arith.constant 0.000000e+00 : f32
    %56 = vector.shape_cast %43 : vector<1x1xf32> to vector<1x1xf32>
    %57 = vector.broadcast %56 : vector<1x1xf32> to vector<8x128xf32>
    %58 = vector.broadcast %cst_11 : f32 to vector<8x128xf32>
    %59 = arith.select %55, %57, %58 : vector<8x128xi1>, vector<8x128xf32>
    %60 = arith.addf %53, %59 : vector<8x128xf32>
    %c2_i32 = arith.constant 2 : i32
    %61 = vector.broadcast %c2_i32 : i32 to vector<8x128xi32>
    %62 = arith.cmpi eq, %47, %61 : vector<8x128xi32>
    %cst_12 = arith.constant 0.000000e+00 : f32
    %63 = vector.shape_cast %46 : vector<1x1xf32> to vector<1x1xf32>
    %64 = vector.broadcast %63 : vector<1x1xf32> to vector<8x128xf32>
    %65 = vector.broadcast %cst_12 : f32 to vector<8x128xf32>
    %66 = arith.select %62, %64, %65 : vector<8x128xi1>, vector<8x128xf32>
    %67 = arith.addf %60, %66 : vector<8x128xf32>
    %c0_13 = arith.constant 0 : index
    %c0_14 = arith.constant 0 : index
    %68 = vector.load %arg5[%c0_13, %c0_14] : memref<8x128xf32, #tpu.memory_space<vmem>>, vector<8x128xf32>
    tpu.vector_store %arg5[%c0_13, %c0_14], %67 {strides = array<i32>} : memref<8x128xf32, #tpu.memory_space<vmem>>, vector<8x128xf32>,
    return
  }
  func.func @transform_0(%arg0: i32, %arg1: i32, %arg2: memref<1xi32, #tpu.memory_space<smem>>) -> (i32, i32) {
    %c0_i32 = arith.constant 0 : i32
    %c0_i32_0 = arith.constant 0 : i32
    return %c0_i32, %arg1 : i32, i32
  }
  func.func @transform_1(%arg0: i32, %arg1: i32, %arg2: memref<1xi32, #tpu.memory_space<smem>>) -> (i32, i32) {
    %c0_i32 = arith.constant 0 : i32
    %c0_i32_0 = arith.constant 0 : i32
    return %arg0, %c0_i32 : i32, i32
  }
  func.func @transform_2(%arg0: i32, %arg1: i32, %arg2: memref<1xi32, #tpu.memory_space<smem>>) -> (i32, i32) {
    %c0_i32 = arith.constant 0 : i32
    %c0_i32_0 = arith.constant 0 : i32
    return %c0_i32, %arg0 : i32, i32
  }
}

module attributes {stable_mosaic.version = 11 : i64} {
  func.func @kernel(%arg0: i32, %arg1: i32, %arg2: memref<1xi32, #tpu.memory_space<smem>>, %arg3: memref<16x128xbf16, #tpu.memory_space<vmem>>, %arg4: memref<48x3xi32, #tpu.memory_space<vmem>>, %arg5: memref<8x128xf32, #tpu.memory_space<vmem>>) attributes {dimension_semantics = [#tpu.dimension_semantics<parallel>, #tpu.dimension_semantics<arbitrary>], iteration_bounds = array<i64: 1, 1>, scalar_prefetch = 1 : i64, scratch_operands = 0 : i64, tpu.core_type = #tpu.core_type<tc>, window_params = [{transform_indices = @transform_0, window_bounds = array<i64: 16, 128>}, {transform_indices = @transform_1, window_bounds = array<i64: 48, 3>}, {transform_indices = @transform_2, window_bounds = array<i64: 8, 128>}]} {
    %c0 = arith.constant 0 : index
    %c0_0 = arith.constant 0 : index
    %0 = vector.load %arg4[%c0, %c0_0] : memref<48x3xi32, #tpu.memory_space<vmem>>, vector<48x3xi32>
    %c0_1 = arith.constant 0 : index
    %c0_2 = arith.constant 0 : index
    %1 = vector.load %arg3[%c0_1, %c0_2] : memref<16x128xbf16, #tpu.memory_space<vmem>>, vector<16x128xbf16>
    %2 = vector.extract_strided_slice %0 {offsets = [0, 0], sizes = [48, 1], strides = [1, 1]} : vector<48x3xi32> to vector<48x1xi32>
    %3 = tpu.concatenate %2, %2 in 0 : vector<48x1xi32>, vector<48x1xi32> -> vector<96x1xi32>
    %4 = vector.extract_strided_slice %0 {offsets = [0, 1], sizes = [48, 1], strides = [1, 1]} : vector<48x3xi32> to vector<48x1xi32>
    %5 = vector.extract_strided_slice %0 {offsets = [0, 2], sizes = [48, 1], strides = [1, 1]} : vector<48x3xi32> to vector<48x1xi32>
    %6 = tpu.concatenate %4, %5 in 0 : vector<48x1xi32>, vector<48x1xi32> -> vector<96x1xi32>
    %7 = tpu.iota {dimensions = array<i32: 1>} : vector<96x16xi32>
    %8 = vector.broadcast %3 : vector<96x1xi32> to vector<96x16xi32>
    %9 = arith.cmpi eq, %8, %7 : vector<96x16xi32>
    %10 = arith.extui %9 : vector<96x16xi1> to vector<96x16xi32>
    %11 = vector.broadcast %6 : vector<96x1xi32> to vector<96x16xi32>
    %12 = arith.cmpi eq, %11, %7 : vector<96x16xi32>
    %13 = arith.extui %12 : vector<96x16xi1> to vector<96x16xi32>
    %14 = arith.subi %10, %13 : vector<96x16xi32>
    %15 = arith.sitofp %14 : vector<96x16xi32> to vector<96x16xbf16>
    %cst = arith.constant dense<0.000000e+00> : vector<96x128xf32>
    %16 = tpu.matmul %15, %1, %cst {dimension_numbers = #tpu.dot_dimension_numbers<[1], [0], [0], [1], [0, 0, 1, 1], [], []>} : vector<96x16xbf16>, vector<16x128xbf16>, vector<96x128xf32> -> vector<96x128xf32>
    %17 = arith.mulf %16, %16 : vector<96x128xf32>
    %cst_3 = arith.constant dense<0.000000e+00> : vector<96xf32>
    %18 = vector.multi_reduction <add>, %17, %cst_3 [1] : vector<96x128xf32> to vector<96xf32>
    %19 = vector.shape_cast %18 : vector<96xf32> to vector<96x1xf32>
    %c0_4 = arith.constant 0 : index
    %20 = memref.load %arg2[%c0_4] : memref<1xi32, #tpu.memory_space<smem>>
    %21 = vector.extract_strided_slice %19 {offsets = [0, 0], sizes = [48, 1], strides = [1, 1]} : vector<96x1xf32> to vector<48x1xf32>
    %22 = math.sqrt %21 : vector<48x1xf32>
    %23 = vector.extract_strided_slice %19 {offsets = [48, 0], sizes = [48, 1], strides = [1, 1]} : vector<96x1xf32> to vector<48x1xf32>
    %24 = math.sqrt %23 : vector<48x1xf32>
    %25 = arith.subf %22, %24 : vector<48x1xf32>
    %cst_5 = arith.constant 1.000000e+00 : f32
    %26 = vector.broadcast %cst_5 : f32 to vector<48x1xf32>
    %27 = arith.addf %25, %26 : vector<48x1xf32>
    %cst_6 = arith.constant 0.000000e+00 : f32
    %28 = vector.broadcast %cst_6 : f32 to vector<48x1xf32>
    %29 = arith.maximumf %27, %28 : vector<48x1xf32>
    %30 = tpu.iota {dimensions = array<i32: 0>} : vector<48x1xi32>
    %c48_i32 = arith.constant 48 : i32
    %31 = arith.muli %arg0, %c48_i32 : i32
    %32 = vector.broadcast %31 : i32 to vector<48x1xi32>
    %33 = arith.addi %30, %32 : vector<48x1xi32>
    %34 = vector.broadcast %20 : i32 to vector<48x1xi32>
    %35 = arith.cmpi slt, %33, %34 : vector<48x1xi32>
    %36 = arith.extui %35 : vector<48x1xi1> to vector<48x1xi32>
    %37 = arith.sitofp %36 : vector<48x1xi32> to vector<48x1xf32>
    %38 = arith.mulf %29, %37 : vector<48x1xf32>
    %cst_7 = arith.constant dense<0.000000e+00> : vector<1xf32>
    %39 = vector.multi_reduction <add>, %38, %cst_7 [0] : vector<48x1xf32> to vector<1xf32>
    %40 = vector.shape_cast %39 : vector<1xf32> to vector<1x1xf32>
    %41 = arith.mulf %22, %37 : vector<48x1xf32>
    %cst_8 = arith.constant dense<0.000000e+00> : vector<1xf32>
    %42 = vector.multi_reduction <add>, %41, %cst_8 [0] : vector<48x1xf32> to vector<1xf32>
    %43 = vector.shape_cast %42 : vector<1xf32> to vector<1x1xf32>
    %44 = arith.mulf %24, %37 : vector<48x1xf32>
    %cst_9 = arith.constant dense<0.000000e+00> : vector<1xf32>
    %45 = vector.multi_reduction <add>, %44, %cst_9 [0] : vector<48x1xf32> to vector<1xf32>
    %46 = vector.shape_cast %45 : vector<1xf32> to vector<1x1xf32>
    %47 = tpu.iota {dimensions = array<i32: 1>} : vector<8x128xi32>
    %c0_i32 = arith.constant 0 : i32
    %48 = vector.broadcast %c0_i32 : i32 to vector<8x128xi32>
    %49 = arith.cmpi eq, %47, %48 : vector<8x128xi32>
    %cst_10 = arith.constant 0.000000e+00 : f32
    %50 = vector.shape_cast %40 : vector<1x1xf32> to vector<1x1xf32>
    %51 = vector.broadcast %50 : vector<1x1xf32> to vector<8x128xf32>
    %52 = vector.broadcast %cst_10 : f32 to vector<8x128xf32>
    %53 = arith.select %49, %51, %52 : vector<8x128xi1>, vector<8x128xf32>
    %c1_i32 = arith.constant 1 : i32
    %54 = vector.broadcast %c1_i32 : i32 to vector<8x128xi32>
    %55 = arith.cmpi eq, %47, %54 : vector<8x128xi32>
    %cst_11 = arith.constant 0.000000e+00 : f32
    %56 = vector.shape_cast %43 : vector<1x1xf32> to vector<1x1xf32>
    %57 = vector.broadcast %56 : vector<1x1xf32> to vector<8x128xf32>
    %58 = vector.broadcast %cst_11 : f32 to vector<8x128xf32>
    %59 = arith.select %55, %57, %58 : vector<8x128xi1>, vector<8x128xf32>
    %60 = arith.addf %53, %59 : vector<8x128xf32>
    %c2_i32 = arith.constant 2 : i32
    %61 = vector.broadcast %c2_i32 : i32 to vector<8x128xi32>
    %62 = arith.cmpi eq, %47, %61 : vector<8x128xi32>
    %cst_12 = arith.constant 0.000000e+00 : f32
    %63 = vector.shape_cast %46 : vector<1x1xf32> to vector<1x1xf32>
    %64 = vector.broadcast %63 : vector<1x1xf32> to vector<8x128xf32>
    %65 = vector.broadcast %cst_12 : f32 to vector<8x128xf32>
    %66 = arith.select %62, %64, %65 : vector<8x128xi1>, vector<8x128xf32>
    %67 = arith.addf %60, %66 : vector<8x128xf32>
    %c0_13 = arith.constant 0 : index
    %c0_14 = arith.constant 0 : index
    %68 = vector.load %arg5[%c0_13, %c0_14] : memref<8x128xf32, #tpu.memory_space<vmem>>, vector<8x128xf32>
    tpu.vector_store %arg5[%c0_13, %c0_14], %67 {strides = array<i32>} : memref<8x128xf32, #tpu.memory_space<vmem>>, vector<8x128xf32>,
    return
  }
  func.func @transform_0(%arg0: i32, %arg1: i32, %arg2: memref<1xi32, #tpu.memory_space<smem>>) -> (i32, i32) {
    %c0_i32 = arith.constant 0 : i32
    %c0_i32_0 = arith.constant 0 : i32
    return %c0_i32, %arg1 : i32, i32
  }
  func.func @transform_1(%arg0: i32, %arg1: i32, %arg2: memref<1xi32, #tpu.memory_space<smem>>) -> (i32, i32) {
    %c0_i32 = arith.constant 0 : i32
    %c0_i32_0 = arith.constant 0 : i32
    return %arg0, %c0_i32 : i32, i32
  }
  func.func @transform_2(%arg0: i32, %arg1: i32, %arg2: memref<1xi32, #tpu.memory_space<smem>>) -> (i32, i32) {
    %c0_i32 = arith.constant 0 : i32
    %c0_i32_0 = arith.constant 0 : i32
    return %c0_i32, %arg0 : i32, i32
  }
}

</mosaic_0001>

<llo_original>
// kernel: tpu_custom_call.1
$region0: #{tpu_custom_call.1}
  #allocation0 [shape = 'u32[]', space=smem, size = 0x4, offset = 0x4, fixed_abs, tag = 'smem constant byte address 0x4 - core index']
  #allocation1 [shape = 'u32[144,128]{1,0:T(1,128)}', space=vmem, size = 0x12000, scoped, tag = 'internal scratch']
  #allocation2 [shape = 's32[1]{0}', space=sflag, size = 0x4, scoped, tag = 'scoped memory for tpu_custom_call.1']
  #allocation3 [shape = 's32[1]{0:T(128)S(6)}', space=smem, size = 0x200, scoped, tag = 'prefetched SMEM operand 0']
  %s0 = inlined_call_operand.<no memory space> [shape: s32[1], index: 0, kind: input, shape index: {}]
  %s1 = inlined_call_operand.vmem [shape: bf16[16,128], index: 1, kind: input, shape index: {}]
  %s2 = inlined_call_operand.vmem [shape: s32[48,3], index: 2, kind: input, shape index: {}]
  %s3 = inlined_call_operand.hbm [shape: f32[8,128], index: 3, kind: output, shape index: {}]
  %s4 = sld [smem:[#allocation0]]
  $region18: #{tpu_custom_call.1} parent=0
    _
  %s6 = ssub.s32 1, %s4
  %s7 = scalar_select 0, %s6, %s4
  %8 = sst [smem:[#allocation3]] %s0
  $region1: #{tpu_custom_call.1} parent=0
    #allocation4 [shape = 'u8[4096]{0}', space=vmem, size = 0x1000, scoped, tag = 'output window, operand 0, single buffered']
    #allocation5 [shape = 's32[1]{0}', space=sflag, size = 0x4, scoped, tag = 'scoped memory for tpu_custom_call.1']
    %9 = vsyncpa [#allocation5], 0
    // Predicated region
    $region2: #{tpu_custom_call.1} parent=1 // pred_check
      _
    $region3: #{tpu_custom_call.1} parent=1 // pred_check_branch
      %11 = sbr.rel (0) target = $region5
    $region4: #{tpu_custom_call.1} parent=1 // pred_region
      _
    $region5: #{tpu_custom_call.1} parent=1 // pred_fallthru
      _
    // Predicated region
    $region6: #{tpu_custom_call.1} parent=1 // pred_check
      _
    $region7: #{tpu_custom_call.1} parent=1 // pred_check_branch
      %13 = sbr.rel (0) target = $region9
    $region8: #{tpu_custom_call.1} parent=1 // pred_region
      _
    $region9: #{tpu_custom_call.1} parent=1 // pred_fallthru
      _
    %v15 = vld [vmem:[%s2] sm:$0xff]
    %v16 = vld [vmem:[%s2 + $0x8] sm:$0xff]
    %v17 = vld [vmem:[%s2 + $0x10] sm:$0xff]
    %v18 = vld [vmem:[%s2 + $0x18] sm:$0xff]
    %v19 = vld [vmem:[%s2 + $0x20] sm:$0xff]
    %v20 = vld [vmem:[%s2 + $0x28] sm:$0xff]
    %v21 = vld [vmem:[%s1] sm:$0xf]
    %v22 = vld [vmem:[%s1 + $0x4] sm:$0xf]
    %23 = vrot.lane.b32.xlu0 %v15, 127
    %v24 = vpop.permute.xlu0 %23
    %25 = vrot.lane.b32.xlu0 %v16, 127
    %v26 = vpop.permute.xlu0 %25
    %27 = vrot.lane.b32.xlu0 %v17, 127
    %v28 = vpop.permute.xlu0 %27
    %29 = vrot.lane.b32.xlu0 %v18, 127
    %v30 = vpop.permute.xlu0 %29
    %31 = vrot.lane.b32.xlu0 %v19, 127
    %v32 = vpop.permute.xlu0 %31
    %33 = vrot.lane.b32.xlu0 %v20, 127
    %v34 = vpop.permute.xlu0 %33
    %v35 = vlaneseq
    %v36 = vand.u32 %v35, 127
    %37 = vset.pattern.permute.xlu0 0
    %38 = vperm.xlu0 %37, %v15
    %v39 = vpop.permute.xlu0 %38
    %40 = vset.pattern.permute.xlu0 0
    %41 = vperm.xlu0 %40, %v16
    %v42 = vpop.permute.xlu0 %41
    %43 = vset.pattern.permute.xlu0 0
    %44 = vperm.xlu0 %43, %v17
    %v45 = vpop.permute.xlu0 %44
    %46 = vset.pattern.permute.xlu0 0
    %47 = vperm.xlu0 %46, %v18
    %v48 = vpop.permute.xlu0 %47
    %49 = vset.pattern.permute.xlu0 0
    %50 = vperm.xlu0 %49, %v19
    %v51 = vpop.permute.xlu0 %50
    %52 = vset.pattern.permute.xlu0 0
    %53 = vperm.xlu0 %52, %v20
    %v54 = vpop.permute.xlu0 %53
    %vm55 = vcmp.eq.s32.totalorder %v39, %v36
    %vm56 = vcmp.eq.s32.totalorder %v42, %v36
    %vm57 = vcmp.eq.s32.totalorder %v45, %v36
    %vm58 = vcmp.eq.s32.totalorder %v48, %v36
    %vm59 = vcmp.eq.s32.totalorder %v51, %v36
    %vm60 = vcmp.eq.s32.totalorder %v54, %v36
    %v61 = vsel %vm55, 1, 0
    %v62 = vsel %vm56, 1, 0
    %v63 = vsel %vm57, 1, 0
    %v64 = vsel %vm58, 1, 0
    %v65 = vsel %vm59, 1, 0
    %v66 = vsel %vm60, 1, 0
    %67 = vset.pattern.permute.xlu0 1
    %68 = vperm.xlu0 %67, %v15
    %v69 = vpop.permute.xlu0 %68
    %70 = vset.pattern.permute.xlu0 1
    %71 = vperm.xlu0 %70, %v16
    %v72 = vpop.permute.xlu0 %71
    %73 = vset.pattern.permute.xlu0 1
    %74 = vperm.xlu0 %73, %v17
    %v75 = vpop.permute.xlu0 %74
    %76 = vset.pattern.permute.xlu0 1
    %77 = vperm.xlu0 %76, %v18
    %v78 = vpop.permute.xlu0 %77
    %79 = vset.pattern.permute.xlu0 1
    %80 = vperm.xlu0 %79, %v19
    %v81 = vpop.permute.xlu0 %80
    %82 = vset.pattern.permute.xlu0 1
    %83 = vperm.xlu0 %82, %v20
    %v84 = vpop.permute.xlu0 %83
    %85 = vset.pattern.permute.xlu0 1
    %86 = vperm.xlu0 %85, %v24
    %v87 = vpop.permute.xlu0 %86
    %88 = vset.pattern.permute.xlu0 1
    %89 = vperm.xlu0 %88, %v26
    %v90 = vpop.permute.xlu0 %89
    %91 = vset.pattern.permute.xlu0 1
    %92 = vperm.xlu0 %91, %v28
    %v93 = vpop.permute.xlu0 %92
    %94 = vset.pattern.permute.xlu0 1
    %95 = vperm.xlu0 %94, %v30
    %v96 = vpop.permute.xlu0 %95
    %97 = vset.pattern.permute.xlu0 1
    %98 = vperm.xlu0 %97, %v32
    %v99 = vpop.permute.xlu0 %98
    %100 = vset.pattern.permute.xlu0 1
    %101 = vperm.xlu0 %100, %v34
    %v102 = vpop.permute.xlu0 %101
    %vm103 = vcmp.eq.s32.totalorder %v69, %v36
    %vm104 = vcmp.eq.s32.totalorder %v72, %v36
    %vm105 = vcmp.eq.s32.totalorder %v75, %v36
    %vm106 = vcmp.eq.s32.totalorder %v78, %v36
    %vm107 = vcmp.eq.s32.totalorder %v81, %v36
    %vm108 = vcmp.eq.s32.totalorder %v84, %v36
    %vm109 = vcmp.eq.s32.totalorder %v87, %v36
    %vm110 = vcmp.eq.s32.totalorder %v90, %v36
    %vm111 = vcmp.eq.s32.totalorder %v93, %v36
    %vm112 = vcmp.eq.s32.totalorder %v96, %v36
    %vm113 = vcmp.eq.s32.totalorder %v99, %v36
    %vm114 = vcmp.eq.s32.totalorder %v102, %v36
    %v115 = vsel %vm103, 1, 0
    %v116 = vsel %vm104, 1, 0
    %v117 = vsel %vm105, 1, 0
    %v118 = vsel %vm106, 1, 0
    %v119 = vsel %vm107, 1, 0
    %v120 = vsel %vm108, 1, 0
    %v121 = vsel %vm109, 1, 0
    %v122 = vsel %vm110, 1, 0
    %v123 = vsel %vm111, 1, 0
    %v124 = vsel %vm112, 1, 0
    %v125 = vsel %vm113, 1, 0
    %v126 = vsel %vm114, 1, 0
    %v127 = vsub.s32 %v61, %v115
    %v128 = vsub.s32 %v62, %v116
    %v129 = vsub.s32 %v63, %v117
    %v130 = vsub.s32 %v64, %v118
    %v131 = vsub.s32 %v65, %v119
    %v132 = vsub.s32 %v66, %v120
    %v133 = vsub.s32 %v61, %v121
    %v134 = vsub.s32 %v62, %v122
    %v135 = vsub.s32 %v63, %v123
    %v136 = vsub.s32 %v64, %v124
    %v137 = vsub.s32 %v65, %v125
    %v138 = vsub.s32 %v66, %v126
    %v139 = vcvt.s32.f32 %v127
    %v140 = vcvt.s32.f32 %v128
    %v141 = vcvt.s32.f32 %v129
    %v142 = vcvt.s32.f32 %v130
    %v143 = vcvt.s32.f32 %v131
    %v144 = vcvt.s32.f32 %v132
    %v145 = vcvt.s32.f32 %v133
    %v146 = vcvt.s32.f32 %v134
    %v147 = vcvt.s32.f32 %v135
    %v148 = vcvt.s32.f32 %v136
    %v149 = vcvt.s32.f32 %v137
    %v150 = vcvt.s32.f32 %v138
    %v151 = vpack.c.bf16 %v140, %v139
    %v152 = vpack.c.bf16 %v142, %v141
    %v153 = vpack.c.bf16 %v144, %v143
    %v154 = vpack.c.bf16 %v146, %v145
    %v155 = vpack.c.bf16 %v148, %v147
    %v156 = vpack.c.bf16 %v150, %v149
    %v159 = vunpack.c.l.b16 %v21
    %v160 = vunpack.c.l.b16 %v22
    %v161 = vpack.c.b16 %v160, %v159
    %vm163 = vcmask 130048
    %v165 = vsel %vm163, %v151, 0
    %v168 = vsel %vm163, %v152, 0
    %v171 = vsel %vm163, %v153, 0
    %v174 = vsel %vm163, %v154, 0
    %v177 = vsel %vm163, %v155, 0
    %v180 = vsel %vm163, %v156, 0
    %182 = vmatprep.subr.bf16.mxu0 0
    %183 = vmatpush1.bf16.msra.mxu0 %v161
    %184 = vmatprep.subr.bf16.mxu0 0
    %185 = vmatpush1.bf16.msra.mxu0 0
    %186 = vmatprep.subr.bf16.mxu0 0
    %187 = vmatpush1.bf16.msra.mxu0 0
    %188 = vmatprep.subr.bf16.mxu0 0
    %189 = vmatpush1.bf16.msra.mxu0 0
    %190 = vmatprep.subr.bf16.mxu0 0
    %191 = vmatpush1.bf16.msra.mxu0 0
    %192 = vmatprep.subr.bf16.mxu0 0
    %193 = vmatpush1.bf16.msra.mxu0 0
    %194 = vmatprep.subr.bf16.mxu0 0
    %195 = vmatpush1.bf16.msra.mxu0 0
    %196 = vmatprep.subr.bf16.mxu0 0
    %197 = vmatpush1.bf16.msra.mxu0 0
    %198 = vmatprep.subr.bf16.mxu0 0
    %199 = vmatpush1.bf16.msra.mxu0 0
    %200 = vmatprep.subr.bf16.mxu0 0
    %201 = vmatpush1.bf16.msra.mxu0 0
    %202 = vmatprep.subr.bf16.mxu0 0
    %203 = vmatpush1.bf16.msra.mxu0 0
    %204 = vmatprep.subr.bf16.mxu0 0
    %205 = vmatpush1.bf16.msra.mxu0 0
    %206 = vmatprep.subr.bf16.mxu0 0
    %207 = vmatpush1.bf16.msra.mxu0 0
    %208 = vmatprep.subr.bf16.mxu0 0
    %209 = vmatpush1.bf16.msra.mxu0 0
    %210 = vmatprep.subr.bf16.mxu0 0
    %211 = vmatpush1.bf16.msra.mxu0 0
    %212 = vmatprep.subr.bf16.mxu0 0
    %213 = vmatpush1.bf16.msra.mxu0 0
    %214 = vmatprep.mubr.bf16.mxu0 0
    %215 = vmatmul.mubr.bf16.gmra.mrb[0].mxu0 %v165
    %v216 = vpop.f32.mrb[0].mxu0
    %v217 = vadd.f32 0.0, %v216
    %v218 = vpop.f32.mrb[0].mxu0
    %v219 = vpop.f32.mrb[0].mxu0
    %v220 = vadd.f32 0.0, %v219
    %v221 = vpop.f32.mrb[0].mxu0
    %222 = vmatprep.mubr.bf16.mxu0 0
    %223 = vmatmul.mubr.bf16.gmra.mrb[0].mxu0 %v168
    %v224 = vpop.f32.mrb[0].mxu0
    %v225 = vadd.f32 0.0, %v224
    %v226 = vpop.f32.mrb[0].mxu0
    %v227 = vpop.f32.mrb[0].mxu0
    %v228 = vadd.f32 0.0, %v227
    %v229 = vpop.f32.mrb[0].mxu0
    %230 = vmatprep.mubr.bf16.mxu0 0
    %231 = vmatmul.mubr.bf16.gmra.mrb[0].mxu0 %v171
    %v232 = vpop.f32.mrb[0].mxu0
    %v233 = vadd.f32 0.0, %v232
    %v234 = vpop.f32.mrb[0].mxu0
    %v235 = vpop.f32.mrb[0].mxu0
    %v236 = vadd.f32 0.0, %v235
    %v237 = vpop.f32.mrb[0].mxu0
    %238 = vmatprep.mubr.bf16.mxu0 0
    %239 = vmatmul.mubr.bf16.gmra.mrb[0].mxu0 %v174
    %v240 = vpop.f32.mrb[0].mxu0
    %v241 = vadd.f32 0.0, %v240
    %v242 = vpop.f32.mrb[0].mxu0
    %v243 = vpop.f32.mrb[0].mxu0
    %v244 = vadd.f32 0.0, %v243
    %v245 = vpop.f32.mrb[0].mxu0
    %246 = vmatprep.mubr.bf16.mxu0 0
    %247 = vmatmul.mubr.bf16.gmra.mrb[0].mxu0 %v177
    %v248 = vpop.f32.mrb[0].mxu0
    %v249 = vadd.f32 0.0, %v248
    %v250 = vpop.f32.mrb[0].mxu0
    %v251 = vpop.f32.mrb[0].mxu0
    %v252 = vadd.f32 0.0, %v251
    %v253 = vpop.f32.mrb[0].mxu0
    %254 = vmatprep.mubr.bf16.mxu0 0
    %255 = vmatmul.mubr.bf16.gmra.mrb[0].mxu0 %v180
    %v256 = vpop.f32.mrb[0].mxu0
    %v257 = vadd.f32 0.0, %v256
    %v258 = vpop.f32.mrb[0].mxu0
    %v259 = vpop.f32.mrb[0].mxu0
    %v260 = vadd.f32 0.0, %v259
    %v261 = vpop.f32.mrb[0].mxu0
    %262 = vdwg.mxu0
    %v263 = vmul.f32 %v217, %v217
    %v264 = vmul.f32 %v220, %v220
    %v265 = vmul.f32 %v225, %v225
    %v266 = vmul.f32 %v228, %v228
    %v267 = vmul.f32 %v233, %v233
    %v268 = vmul.f32 %v236, %v236
    %v269 = vmul.f32 %v241, %v241
    %v270 = vmul.f32 %v244, %v244
    %v271 = vmul.f32 %v249, %v249
    %v272 = vmul.f32 %v252, %v252
    %v273 = vmul.f32 %v257, %v257
    %v274 = vmul.f32 %v260, %v260
    %275 = vadd.xlane.f32.xlu0 %v263
    %v276 = vpop.xlane.xlu0 %275
    %277 = vadd.xlane.f32.xlu0 %v264
    %v278 = vpop.xlane.xlu0 %277
    %279 = vadd.xlane.f32.xlu0 %v265
    %v280 = vpop.xlane.xlu0 %279
    %281 = vadd.xlane.f32.xlu0 %v266
    %v282 = vpop.xlane.xlu0 %281
    %283 = vadd.xlane.f32.xlu0 %v267
    %v284 = vpop.xlane.xlu0 %283
    %285 = vadd.xlane.f32.xlu0 %v268
    %v286 = vpop.xlane.xlu0 %285
    %287 = vadd.xlane.f32.xlu0 %v269
    %v288 = vpop.xlane.xlu0 %287
    %289 = vadd.xlane.f32.xlu0 %v270
    %v290 = vpop.xlane.xlu0 %289
    %291 = vadd.xlane.f32.xlu0 %v271
    %v292 = vpop.xlane.xlu0 %291
    %293 = vadd.xlane.f32.xlu0 %v272
    %v294 = vpop.xlane.xlu0 %293
    %295 = vadd.xlane.f32.xlu0 %v273
    %v296 = vpop.xlane.xlu0 %295
    %297 = vadd.xlane.f32.xlu0 %v274
    %v298 = vpop.xlane.xlu0 %297
    %s299 = sld [smem:[#allocation3]]
    %v300 = vrsqrt.pop %v276
    %v301 = vmul.f32 %v276, %v300
    %vm302 = vcmp.eq.f32.partialorder %v276, inf
    %v303 = vsel %vm302, %v276, %v301
    %vm304 = vcmp.eq.f32.partialorder %v276, 0.0
    %v305 = vand.u32 %v276, 2147483648
    %v306 = vsel %vm304, %v305, %v303
    %v307 = vrsqrt.pop %v278
    %v308 = vmul.f32 %v278, %v307
    %vm309 = vcmp.eq.f32.partialorder %v278, inf
    %v310 = vsel %vm309, %v278, %v308
    %vm311 = vcmp.eq.f32.partialorder %v278, 0.0
    %v312 = vand.u32 %v278, 2147483648
    %v313 = vsel %vm311, %v312, %v310
    %v314 = vrsqrt.pop %v280
    %v315 = vmul.f32 %v280, %v314
    %vm316 = vcmp.eq.f32.partialorder %v280, inf
    %v317 = vsel %vm316, %v280, %v315
    %vm318 = vcmp.eq.f32.partialorder %v280, 0.0
    %v319 = vand.u32 %v280, 2147483648
    %v320 = vsel %vm318, %v319, %v317
    %v321 = vrsqrt.pop %v282
    %v322 = vmul.f32 %v282, %v321
    %vm323 = vcmp.eq.f32.partialorder %v282, inf
    %v324 = vsel %vm323, %v282, %v322
    %vm325 = vcmp.eq.f32.partialorder %v282, 0.0
    %v326 = vand.u32 %v282, 2147483648
    %v327 = vsel %vm325, %v326, %v324
    %v328 = vrsqrt.pop %v284
    %v329 = vmul.f32 %v284, %v328
    %vm330 = vcmp.eq.f32.partialorder %v284, inf
    %v331 = vsel %vm330, %v284, %v329
    %vm332 = vcmp.eq.f32.partialorder %v284, 0.0
    %v333 = vand.u32 %v284, 2147483648
    %v334 = vsel %vm332, %v333, %v331
    %v335 = vrsqrt.pop %v286
    %v336 = vmul.f32 %v286, %v335
    %vm337 = vcmp.eq.f32.partialorder %v286, inf
    %v338 = vsel %vm337, %v286, %v336
    %vm339 = vcmp.eq.f32.partialorder %v286, 0.0
    %v340 = vand.u32 %v286, 2147483648
    %v341 = vsel %vm339, %v340, %v338
    %v342 = vrsqrt.pop %v288
    %v343 = vmul.f32 %v288, %v342
    %vm344 = vcmp.eq.f32.partialorder %v288, inf
    %v345 = vsel %vm344, %v288, %v343
    %vm346 = vcmp.eq.f32.partialorder %v288, 0.0
    %v347 = vand.u32 %v288, 2147483648
    %v348 = vsel %vm346, %v347, %v345
    %v349 = vrsqrt.pop %v290
    %v350 = vmul.f32 %v290, %v349
    %vm351 = vcmp.eq.f32.partialorder %v290, inf
    %v352 = vsel %vm351, %v290, %v350
    %vm353 = vcmp.eq.f32.partialorder %v290, 0.0
    %v354 = vand.u32 %v290, 2147483648
    %v355 = vsel %vm353, %v354, %v352
    %v356 = vrsqrt.pop %v292
    %v357 = vmul.f32 %v292, %v356
    %vm358 = vcmp.eq.f32.partialorder %v292, inf
    %v359 = vsel %vm358, %v292, %v357
    %vm360 = vcmp.eq.f32.partialorder %v292, 0.0
    %v361 = vand.u32 %v292, 2147483648
    %v362 = vsel %vm360, %v361, %v359
    %v363 = vrsqrt.pop %v294
    %v364 = vmul.f32 %v294, %v363
    %vm365 = vcmp.eq.f32.partialorder %v294, inf
    %v366 = vsel %vm365, %v294, %v364
    %vm367 = vcmp.eq.f32.partialorder %v294, 0.0
    %v368 = vand.u32 %v294, 2147483648
    %v369 = vsel %vm367, %v368, %v366
    %v370 = vrsqrt.pop %v296
    %v371 = vmul.f32 %v296, %v370
    %vm372 = vcmp.eq.f32.partialorder %v296, inf
    %v373 = vsel %vm372, %v296, %v371
    %vm374 = vcmp.eq.f32.partialorder %v296, 0.0
    %v375 = vand.u32 %v296, 2147483648
    %v376 = vsel %vm374, %v375, %v373
    %v377 = vrsqrt.pop %v298
    %v378 = vmul.f32 %v298, %v377
    %vm379 = vcmp.eq.f32.partialorder %v298, inf
    %v380 = vsel %vm379, %v298, %v378
    %vm381 = vcmp.eq.f32.partialorder %v298, 0.0
    %v382 = vand.u32 %v298, 2147483648
    %v383 = vsel %vm381, %v382, %v380
    %v384 = vsub.f32 %v306, %v348
    %v385 = vsub.f32 %v313, %v355
    %v386 = vsub.f32 %v320, %v362
    %v387 = vsub.f32 %v327, %v369
    %v388 = vsub.f32 %v334, %v376
    %v389 = vsub.f32 %v341, %v383
    %v390 = vadd.f32 %v384, 1.0
    %v391 = vadd.f32 %v385, 1.0
    %v392 = vadd.f32 %v386, 1.0
    %v393 = vadd.f32 %v387, 1.0
    %v394 = vadd.f32 %v388, 1.0
    %v395 = vadd.f32 %v389, 1.0
    %v396 = vmax.f32 %v390, 0.0
    %v397 = vmax.f32 %v391, 0.0
    %v398 = vmax.f32 %v392, 0.0
    %v399 = vmax.f32 %v393, 0.0
    %v400 = vmax.f32 %v394, 0.0
    %v401 = vmax.f32 %v395, 0.0
    %v402 = vlaneseq
    %v403 = vshrl.u32 %v402, 7
    %v404 = vadd.s32 %v403, 8
    %v405 = vadd.s32 %v403, 16
    %v406 = vadd.s32 %v403, 24
    %v407 = vadd.s32 %v403, 32
    %v408 = vadd.s32 %v403, 40
    %s409 = smul.u32 0, 48
    %v410 = vstv %s409
    %v411 = vadd.s32 %v403, %v410
    %v412 = vadd.s32 %v404, %v410
    %v413 = vadd.s32 %v405, %v410
    %v414 = vadd.s32 %v406, %v410
    %v415 = vadd.s32 %v407, %v410
    %v416 = vadd.s32 %v408, %v410
    %v417 = vstv %s299
    %vm418 = vcmp.lt.s32.totalorder %v411, %v417
    %vm419 = vcmp.lt.s32.totalorder %v412, %v417
    %vm420 = vcmp.lt.s32.totalorder %v413, %v417
    %vm421 = vcmp.lt.s32.totalorder %v414, %v417
    %vm422 = vcmp.lt.s32.totalorder %v415, %v417
    %vm423 = vcmp.lt.s32.totalorder %v416, %v417
    %v424 = vsel %vm418, 1, 0
    %v425 = vsel %vm419, 1, 0
    %v426 = vsel %vm420, 1, 0
    %v427 = vsel %vm421, 1, 0
    %v428 = vsel %vm422, 1, 0
    %v429 = vsel %vm423, 1, 0
    %v430 = vcvt.s32.f32 %v424
    %v431 = vcvt.s32.f32 %v425
    %v432 = vcvt.s32.f32 %v426
    %v433 = vcvt.s32.f32 %v427
    %v434 = vcvt.s32.f32 %v428
    %v435 = vcvt.s32.f32 %v429
    %v436 = vmul.f32 %v396, %v430
    %v437 = vmul.f32 %v397, %v431
    %v438 = vmul.f32 %v398, %v432
    %v439 = vmul.f32 %v399, %v433
    %v440 = vmul.f32 %v400, %v434
    %v441 = vmul.f32 %v401, %v435
    %v442 = vadd.f32 %v436, %v437
    %v443 = vadd.f32 %v442, %v438
    %v444 = vadd.f32 %v443, %v439
    %v445 = vadd.f32 %v444, %v440
    %v446 = vadd.f32 %v445, %v441
    %v447 = vrot.slane %v446, 4
    %v448 = vadd.f32 %v446, %v447
    %v449 = vrot.slane %v448, 2
    %v450 = vadd.f32 %v448, %v449
    %v451 = vrot.slane %v450, 1
    %v452 = vadd.f32 %v450, %v451
    %v453 = vmul.f32 %v306, %v430
    %v454 = vmul.f32 %v313, %v431
    %v455 = vmul.f32 %v320, %v432
    %v456 = vmul.f32 %v327, %v433
    %v457 = vmul.f32 %v334, %v434
    %v458 = vmul.f32 %v341, %v435
    %v459 = vadd.f32 %v453, %v454
    %v460 = vadd.f32 %v459, %v455
    %v461 = vadd.f32 %v460, %v456
    %v462 = vadd.f32 %v461, %v457
    %v463 = vadd.f32 %v462, %v458
    %v464 = vrot.slane %v463, 4
    %v465 = vadd.f32 %v463, %v464
    %v466 = vrot.slane %v465, 2
    %v467 = vadd.f32 %v465, %v466
    %v468 = vrot.slane %v467, 1
    %v469 = vadd.f32 %v467, %v468
    %v470 = vmul.f32 %v348, %v430
    %v471 = vmul.f32 %v355, %v431
    %v472 = vmul.f32 %v362, %v432
    %v473 = vmul.f32 %v369, %v433
    %v474 = vmul.f32 %v376, %v434
    %v475 = vmul.f32 %v383, %v435
    %v476 = vadd.f32 %v470, %v471
    %v477 = vadd.f32 %v476, %v472
    %v478 = vadd.f32 %v477, %v473
    %v479 = vadd.f32 %v478, %v474
    %v480 = vadd.f32 %v479, %v475
    %v481 = vrot.slane %v480, 4
    %v482 = vadd.f32 %v480, %v481
    %v483 = vrot.slane %v482, 2
    %v484 = vadd.f32 %v482, %v483
    %v485 = vrot.slane %v484, 1
    %v486 = vadd.f32 %v484, %v485
    %vm487 = vcmp.eq.s32.totalorder %v36, 0
    %v488 = vsel %vm487, %v452, 0.0
    %vm489 = vcmp.eq.s32.totalorder %v36, 1
    %v490 = vsel %vm489, %v469, 0.0
    %v491 = vadd.f32 %v488, %v490
    %vm492 = vcmp.eq.s32.totalorder %v36, 2
    %v493 = vsel %vm492, %v486, 0.0
    %v494 = vadd.f32 %v491, %v493
    %495 = vst [vmem:[#allocation4] sm:$0xff] %v494
    // Predicated region
    $region10: #{tpu_custom_call.1} parent=1 // pred_check
      _
    $region11: #{tpu_custom_call.1} parent=1 // pred_check_branch
      %497 = sbr.rel (0) target = $region13
    $region12: #{tpu_custom_call.1} parent=1 // pred_region
      %s499 = ssub.s32 128, 128
      %500 = vsyncadd [#allocation5], %s499
      %s502 = sshll.u32 [#allocation4], 4
      %s503 = int_to_ptr.vmem [resolvable:$true] %s502
      %505 = dma.vmem_to_hbm [thread:$0]  %s503, 128, %s3, [#allocation5]
    $region13: #{tpu_custom_call.1} parent=1 // pred_fallthru
      _
    // Predicated region
    $region14: #{tpu_custom_call.1} parent=1 // pred_check
      _
    $region15: #{tpu_custom_call.1} parent=1 // pred_check_branch
      %507 = sbr.rel (0) target = $region17
    $region16: #{tpu_custom_call.1} parent=1 // pred_region
      %508 = dma.done [#allocation5], 128
    $region17: #{tpu_custom_call.1} parent=1 // pred_fallthru
      _
    %509 = vsyncpa [#allocation5], 1

// kernel: tpu_custom_call.1
$region0: #{tpu_custom_call.1}
  #allocation0 [shape = 'u32[]', space=smem, size = 0x4, offset = 0x4, fixed_abs, tag = 'smem constant byte address 0x4 - core index']
  #allocation1 [shape = 'u32[144,128]{1,0:T(1,128)}', space=vmem, size = 0x12000, scoped, tag = 'internal scratch']
  #allocation2 [shape = 's32[1]{0}', space=sflag, size = 0x4, scoped, tag = 'scoped memory for tpu_custom_call.1']
  #allocation3 [shape = 's32[1]{0:T(128)S(6)}', space=smem, size = 0x200, scoped, tag = 'prefetched SMEM operand 0']
  %s0 = inlined_call_operand.<no memory space> [shape: s32[1], index: 0, kind: input, shape index: {}]
  %s1 = inlined_call_operand.vmem [shape: bf16[16,128], index: 1, kind: input, shape index: {}]
  %s2 = inlined_call_operand.vmem [shape: s32[48,3], index: 2, kind: input, shape index: {}]
  %s3 = inlined_call_operand.hbm [shape: f32[8,128], index: 3, kind: output, shape index: {}]
  %s4 = sld [smem:[#allocation0]]
  $region18: #{tpu_custom_call.1} parent=0
    _
  %s6 = ssub.s32 1, %s4
  %s7 = scalar_select 0, %s6, %s4
  %8 = sst [smem:[#allocation3]] %s0
  $region1: #{tpu_custom_call.1} parent=0
    #allocation4 [shape = 'u8[4096]{0}', space=vmem, size = 0x1000, scoped, tag = 'output window, operand 0, single buffered']
    #allocation5 [shape = 's32[1]{0}', space=sflag, size = 0x4, scoped, tag = 'scoped memory for tpu_custom_call.1']
    %9 = vsyncpa [#allocation5], 0
    // Predicated region
    $region2: #{tpu_custom_call.1} parent=1 // pred_check
      _
    $region3: #{tpu_custom_call.1} parent=1 // pred_check_branch
      %11 = sbr.rel (0) target = $region5
    $region4: #{tpu_custom_call.1} parent=1 // pred_region
      _
    $region5: #{tpu_custom_call.1} parent=1 // pred_fallthru
      _
    // Predicated region
    $region6: #{tpu_custom_call.1} parent=1 // pred_check
      _
    $region7: #{tpu_custom_call.1} parent=1 // pred_check_branch
      %13 = sbr.rel (0) target = $region9
    $region8: #{tpu_custom_call.1} parent=1 // pred_region
      _
    $region9: #{tpu_custom_call.1} parent=1 // pred_fallthru
      _
    %v15 = vld [vmem:[%s2] sm:$0xff]
    %v16 = vld [vmem:[%s2 + $0x8] sm:$0xff]
    %v17 = vld [vmem:[%s2 + $0x10] sm:$0xff]
    %v18 = vld [vmem:[%s2 + $0x18] sm:$0xff]
    %v19 = vld [vmem:[%s2 + $0x20] sm:$0xff]
    %v20 = vld [vmem:[%s2 + $0x28] sm:$0xff]
    %v21 = vld [vmem:[%s1] sm:$0xf]
    %v22 = vld [vmem:[%s1 + $0x4] sm:$0xf]
    %23 = vrot.lane.b32.xlu0 %v15, 127
    %v24 = vpop.permute.xlu0 %23
    %25 = vrot.lane.b32.xlu0 %v16, 127
    %v26 = vpop.permute.xlu0 %25
    %27 = vrot.lane.b32.xlu0 %v17, 127
    %v28 = vpop.permute.xlu0 %27
    %29 = vrot.lane.b32.xlu0 %v18, 127
    %v30 = vpop.permute.xlu0 %29
    %31 = vrot.lane.b32.xlu0 %v19, 127
    %v32 = vpop.permute.xlu0 %31
    %33 = vrot.lane.b32.xlu0 %v20, 127
    %v34 = vpop.permute.xlu0 %33
    %v35 = vlaneseq
    %v36 = vand.u32 %v35, 127
    %37 = vset.pattern.permute.xlu0 0
    %38 = vperm.xlu0 %37, %v15
    %v39 = vpop.permute.xlu0 %38
    %40 = vset.pattern.permute.xlu0 0
    %41 = vperm.xlu0 %40, %v16
    %v42 = vpop.permute.xlu0 %41
    %43 = vset.pattern.permute.xlu0 0
    %44 = vperm.xlu0 %43, %v17
    %v45 = vpop.permute.xlu0 %44
    %46 = vset.pattern.permute.xlu0 0
    %47 = vperm.xlu0 %46, %v18
    %v48 = vpop.permute.xlu0 %47
    %49 = vset.pattern.permute.xlu0 0
    %50 = vperm.xlu0 %49, %v19
    %v51 = vpop.permute.xlu0 %50
    %52 = vset.pattern.permute.xlu0 0
    %53 = vperm.xlu0 %52, %v20
    %v54 = vpop.permute.xlu0 %53
    %vm55 = vcmp.eq.s32.totalorder %v39, %v36
    %vm56 = vcmp.eq.s32.totalorder %v42, %v36
    %vm57 = vcmp.eq.s32.totalorder %v45, %v36
    %vm58 = vcmp.eq.s32.totalorder %v48, %v36
    %vm59 = vcmp.eq.s32.totalorder %v51, %v36
    %vm60 = vcmp.eq.s32.totalorder %v54, %v36
    %v61 = vsel %vm55, 1, 0
    %v62 = vsel %vm56, 1, 0
    %v63 = vsel %vm57, 1, 0
    %v64 = vsel %vm58, 1, 0
    %v65 = vsel %vm59, 1, 0
    %v66 = vsel %vm60, 1, 0
    %67 = vset.pattern.permute.xlu0 1
    %68 = vperm.xlu0 %67, %v15
    %v69 = vpop.permute.xlu0 %68
    %70 = vset.pattern.permute.xlu0 1
    %71 = vperm.xlu0 %70, %v16
    %v72 = vpop.permute.xlu0 %71
    %73 = vset.pattern.permute.xlu0 1
    %74 = vperm.xlu0 %73, %v17
    %v75 = vpop.permute.xlu0 %74
    %76 = vset.pattern.permute.xlu0 1
    %77 = vperm.xlu0 %76, %v18
    %v78 = vpop.permute.xlu0 %77
    %79 = vset.pattern.permute.xlu0 1
    %80 = vperm.xlu0 %79, %v19
    %v81 = vpop.permute.xlu0 %80
    %82 = vset.pattern.permute.xlu0 1
    %83 = vperm.xlu0 %82, %v20
    %v84 = vpop.permute.xlu0 %83
    %85 = vset.pattern.permute.xlu0 1
    %86 = vperm.xlu0 %85, %v24
    %v87 = vpop.permute.xlu0 %86
    %88 = vset.pattern.permute.xlu0 1
    %89 = vperm.xlu0 %88, %v26
    %v90 = vpop.permute.xlu0 %89
    %91 = vset.pattern.permute.xlu0 1
    %92 = vperm.xlu0 %91, %v28
    %v93 = vpop.permute.xlu0 %92
    %94 = vset.pattern.permute.xlu0 1
    %95 = vperm.xlu0 %94, %v30
    %v96 = vpop.permute.xlu0 %95
    %97 = vset.pattern.permute.xlu0 1
    %98 = vperm.xlu0 %97, %v32
    %v99 = vpop.permute.xlu0 %98
    %100 = vset.pattern.permute.xlu0 1
    %101 = vperm.xlu0 %100, %v34
    %v102 = vpop.permute.xlu0 %101
    %vm103 = vcmp.eq.s32.totalorder %v69, %v36
    %vm104 = vcmp.eq.s32.totalorder %v72, %v36
    %vm105 = vcmp.eq.s32.totalorder %v75, %v36
    %vm106 = vcmp.eq.s32.totalorder %v78, %v36
    %vm107 = vcmp.eq.s32.totalorder %v81, %v36
    %vm108 = vcmp.eq.s32.totalorder %v84, %v36
    %vm109 = vcmp.eq.s32.totalorder %v87, %v36
    %vm110 = vcmp.eq.s32.totalorder %v90, %v36
    %vm111 = vcmp.eq.s32.totalorder %v93, %v36
    %vm112 = vcmp.eq.s32.totalorder %v96, %v36
    %vm113 = vcmp.eq.s32.totalorder %v99, %v36
    %vm114 = vcmp.eq.s32.totalorder %v102, %v36
    %v115 = vsel %vm103, 1, 0
    %v116 = vsel %vm104, 1, 0
    %v117 = vsel %vm105, 1, 0
    %v118 = vsel %vm106, 1, 0
    %v119 = vsel %vm107, 1, 0
    %v120 = vsel %vm108, 1, 0
    %v121 = vsel %vm109, 1, 0
    %v122 = vsel %vm110, 1, 0
    %v123 = vsel %vm111, 1, 0
    %v124 = vsel %vm112, 1, 0
    %v125 = vsel %vm113, 1, 0
    %v126 = vsel %vm114, 1, 0
    %v127 = vsub.s32 %v61, %v115
    %v128 = vsub.s32 %v62, %v116
    %v129 = vsub.s32 %v63, %v117
    %v130 = vsub.s32 %v64, %v118
    %v131 = vsub.s32 %v65, %v119
    %v132 = vsub.s32 %v66, %v120
    %v133 = vsub.s32 %v61, %v121
    %v134 = vsub.s32 %v62, %v122
    %v135 = vsub.s32 %v63, %v123
    %v136 = vsub.s32 %v64, %v124
    %v137 = vsub.s32 %v65, %v125
    %v138 = vsub.s32 %v66, %v126
    %v139 = vcvt.s32.f32 %v127
    %v140 = vcvt.s32.f32 %v128
    %v141 = vcvt.s32.f32 %v129
    %v142 = vcvt.s32.f32 %v130
    %v143 = vcvt.s32.f32 %v131
    %v144 = vcvt.s32.f32 %v132
    %v145 = vcvt.s32.f32 %v133
    %v146 = vcvt.s32.f32 %v134
    %v147 = vcvt.s32.f32 %v135
    %v148 = vcvt.s32.f32 %v136
    %v149 = vcvt.s32.f32 %v137
    %v150 = vcvt.s32.f32 %v138
    %v151 = vpack.c.bf16 %v140, %v139
    %v152 = vpack.c.bf16 %v142, %v141
    %v153 = vpack.c.bf16 %v144, %v143
    %v154 = vpack.c.bf16 %v146, %v145
    %v155 = vpack.c.bf16 %v148, %v147
    %v156 = vpack.c.bf16 %v150, %v149
    %v159 = vunpack.c.l.b16 %v21
    %v160 = vunpack.c.l.b16 %v22
    %v161 = vpack.c.b16 %v160, %v159
    %vm163 = vcmask 130048
    %v165 = vsel %vm163, %v151, 0
    %v168 = vsel %vm163, %v152, 0
    %v171 = vsel %vm163, %v153, 0
    %v174 = vsel %vm163, %v154, 0
    %v177 = vsel %vm163, %v155, 0
    %v180 = vsel %vm163, %v156, 0
    %182 = vmatprep.subr.bf16.mxu0 0
    %183 = vmatpush1.bf16.msra.mxu0 %v161
    %184 = vmatprep.subr.bf16.mxu0 0
    %185 = vmatpush1.bf16.msra.mxu0 0
    %186 = vmatprep.subr.bf16.mxu0 0
    %187 = vmatpush1.bf16.msra.mxu0 0
    %188 = vmatprep.subr.bf16.mxu0 0
    %189 = vmatpush1.bf16.msra.mxu0 0
    %190 = vmatprep.subr.bf16.mxu0 0
    %191 = vmatpush1.bf16.msra.mxu0 0
    %192 = vmatprep.subr.bf16.mxu0 0
    %193 = vmatpush1.bf16.msra.mxu0 0
    %194 = vmatprep.subr.bf16.mxu0 0
    %195 = vmatpush1.bf16.msra.mxu0 0
    %196 = vmatprep.subr.bf16.mxu0 0
    %197 = vmatpush1.bf16.msra.mxu0 0
    %198 = vmatprep.subr.bf16.mxu0 0
    %199 = vmatpush1.bf16.msra.mxu0 0
    %200 = vmatprep.subr.bf16.mxu0 0
    %201 = vmatpush1.bf16.msra.mxu0 0
    %202 = vmatprep.subr.bf16.mxu0 0
    %203 = vmatpush1.bf16.msra.mxu0 0
    %204 = vmatprep.subr.bf16.mxu0 0
    %205 = vmatpush1.bf16.msra.mxu0 0
    %206 = vmatprep.subr.bf16.mxu0 0
    %207 = vmatpush1.bf16.msra.mxu0 0
    %208 = vmatprep.subr.bf16.mxu0 0
    %209 = vmatpush1.bf16.msra.mxu0 0
    %210 = vmatprep.subr.bf16.mxu0 0
    %211 = vmatpush1.bf16.msra.mxu0 0
    %212 = vmatprep.subr.bf16.mxu0 0
    %213 = vmatpush1.bf16.msra.mxu0 0
    %214 = vmatprep.mubr.bf16.mxu0 0
    %215 = vmatmul.mubr.bf16.gmra.mrb[0].mxu0 %v165
    %v216 = vpop.f32.mrb[0].mxu0
    %v217 = vadd.f32 0.0, %v216
    %v218 = vpop.f32.mrb[0].mxu0
    %v219 = vpop.f32.mrb[0].mxu0
    %v220 = vadd.f32 0.0, %v219
    %v221 = vpop.f32.mrb[0].mxu0
    %222 = vmatprep.mubr.bf16.mxu0 0
    %223 = vmatmul.mubr.bf16.gmra.mrb[0].mxu0 %v168
    %v224 = vpop.f32.mrb[0].mxu0
    %v225 = vadd.f32 0.0, %v224
    %v226 = vpop.f32.mrb[0].mxu0
    %v227 = vpop.f32.mrb[0].mxu0
    %v228 = vadd.f32 0.0, %v227
    %v229 = vpop.f32.mrb[0].mxu0
    %230 = vmatprep.mubr.bf16.mxu0 0
    %231 = vmatmul.mubr.bf16.gmra.mrb[0].mxu0 %v171
    %v232 = vpop.f32.mrb[0].mxu0
    %v233 = vadd.f32 0.0, %v232
    %v234 = vpop.f32.mrb[0].mxu0
    %v235 = vpop.f32.mrb[0].mxu0
    %v236 = vadd.f32 0.0, %v235
    %v237 = vpop.f32.mrb[0].mxu0
    %238 = vmatprep.mubr.bf16.mxu0 0
    %239 = vmatmul.mubr.bf16.gmra.mrb[0].mxu0 %v174
    %v240 = vpop.f32.mrb[0].mxu0
    %v241 = vadd.f32 0.0, %v240
    %v242 = vpop.f32.mrb[0].mxu0
    %v243 = vpop.f32.mrb[0].mxu0
    %v244 = vadd.f32 0.0, %v243
    %v245 = vpop.f32.mrb[0].mxu0
    %246 = vmatprep.mubr.bf16.mxu0 0
    %247 = vmatmul.mubr.bf16.gmra.mrb[0].mxu0 %v177
    %v248 = vpop.f32.mrb[0].mxu0
    %v249 = vadd.f32 0.0, %v248
    %v250 = vpop.f32.mrb[0].mxu0
    %v251 = vpop.f32.mrb[0].mxu0
    %v252 = vadd.f32 0.0, %v251
    %v253 = vpop.f32.mrb[0].mxu0
    %254 = vmatprep.mubr.bf16.mxu0 0
    %255 = vmatmul.mubr.bf16.gmra.mrb[0].mxu0 %v180
    %v256 = vpop.f32.mrb[0].mxu0
    %v257 = vadd.f32 0.0, %v256
    %v258 = vpop.f32.mrb[0].mxu0
    %v259 = vpop.f32.mrb[0].mxu0
    %v260 = vadd.f32 0.0, %v259
    %v261 = vpop.f32.mrb[0].mxu0
    %262 = vdwg.mxu0
    %v263 = vmul.f32 %v217, %v217
    %v264 = vmul.f32 %v220, %v220
    %v265 = vmul.f32 %v225, %v225
    %v266 = vmul.f32 %v228, %v228
    %v267 = vmul.f32 %v233, %v233
    %v268 = vmul.f32 %v236, %v236
    %v269 = vmul.f32 %v241, %v241
    %v270 = vmul.f32 %v244, %v244
    %v271 = vmul.f32 %v249, %v249
    %v272 = vmul.f32 %v252, %v252
    %v273 = vmul.f32 %v257, %v257
    %v274 = vmul.f32 %v260, %v260
    %275 = vadd.xlane.f32.xlu0 %v263
    %v276 = vpop.xlane.xlu0 %275
    %277 = vadd.xlane.f32.xlu0 %v264
    %v278 = vpop.xlane.xlu0 %277
    %279 = vadd.xlane.f32.xlu0 %v265
    %v280 = vpop.xlane.xlu0 %279
    %281 = vadd.xlane.f32.xlu0 %v266
    %v282 = vpop.xlane.xlu0 %281
    %283 = vadd.xlane.f32.xlu0 %v267
    %v284 = vpop.xlane.xlu0 %283
    %285 = vadd.xlane.f32.xlu0 %v268
    %v286 = vpop.xlane.xlu0 %285
    %287 = vadd.xlane.f32.xlu0 %v269
    %v288 = vpop.xlane.xlu0 %287
    %289 = vadd.xlane.f32.xlu0 %v270
    %v290 = vpop.xlane.xlu0 %289
    %291 = vadd.xlane.f32.xlu0 %v271
    %v292 = vpop.xlane.xlu0 %291
    %293 = vadd.xlane.f32.xlu0 %v272
    %v294 = vpop.xlane.xlu0 %293
    %295 = vadd.xlane.f32.xlu0 %v273
    %v296 = vpop.xlane.xlu0 %295
    %297 = vadd.xlane.f32.xlu0 %v274
    %v298 = vpop.xlane.xlu0 %297
    %s299 = sld [smem:[#allocation3]]
    %v300 = vrsqrt.pop %v276
    %v301 = vmul.f32 %v276, %v300
    %vm302 = vcmp.eq.f32.partialorder %v276, inf
    %v303 = vsel %vm302, %v276, %v301
    %vm304 = vcmp.eq.f32.partialorder %v276, 0.0
    %v305 = vand.u32 %v276, 2147483648
    %v306 = vsel %vm304, %v305, %v303
    %v307 = vrsqrt.pop %v278
    %v308 = vmul.f32 %v278, %v307
    %vm309 = vcmp.eq.f32.partialorder %v278, inf
    %v310 = vsel %vm309, %v278, %v308
    %vm311 = vcmp.eq.f32.partialorder %v278, 0.0
    %v312 = vand.u32 %v278, 2147483648
    %v313 = vsel %vm311, %v312, %v310
    %v314 = vrsqrt.pop %v280
    %v315 = vmul.f32 %v280, %v314
    %vm316 = vcmp.eq.f32.partialorder %v280, inf
    %v317 = vsel %vm316, %v280, %v315
    %vm318 = vcmp.eq.f32.partialorder %v280, 0.0
    %v319 = vand.u32 %v280, 2147483648
    %v320 = vsel %vm318, %v319, %v317
    %v321 = vrsqrt.pop %v282
    %v322 = vmul.f32 %v282, %v321
    %vm323 = vcmp.eq.f32.partialorder %v282, inf
    %v324 = vsel %vm323, %v282, %v322
    %vm325 = vcmp.eq.f32.partialorder %v282, 0.0
    %v326 = vand.u32 %v282, 2147483648
    %v327 = vsel %vm325, %v326, %v324
    %v328 = vrsqrt.pop %v284
    %v329 = vmul.f32 %v284, %v328
    %vm330 = vcmp.eq.f32.partialorder %v284, inf
    %v331 = vsel %vm330, %v284, %v329
    %vm332 = vcmp.eq.f32.partialorder %v284, 0.0
    %v333 = vand.u32 %v284, 2147483648
    %v334 = vsel %vm332, %v333, %v331
    %v335 = vrsqrt.pop %v286
    %v336 = vmul.f32 %v286, %v335
    %vm337 = vcmp.eq.f32.partialorder %v286, inf
    %v338 = vsel %vm337, %v286, %v336
    %vm339 = vcmp.eq.f32.partialorder %v286, 0.0
    %v340 = vand.u32 %v286, 2147483648
    %v341 = vsel %vm339, %v340, %v338
    %v342 = vrsqrt.pop %v288
    %v343 = vmul.f32 %v288, %v342
    %vm344 = vcmp.eq.f32.partialorder %v288, inf
    %v345 = vsel %vm344, %v288, %v343
    %vm346 = vcmp.eq.f32.partialorder %v288, 0.0
    %v347 = vand.u32 %v288, 2147483648
    %v348 = vsel %vm346, %v347, %v345
    %v349 = vrsqrt.pop %v290
    %v350 = vmul.f32 %v290, %v349
    %vm351 = vcmp.eq.f32.partialorder %v290, inf
    %v352 = vsel %vm351, %v290, %v350
    %vm353 = vcmp.eq.f32.partialorder %v290, 0.0
    %v354 = vand.u32 %v290, 2147483648
    %v355 = vsel %vm353, %v354, %v352
    %v356 = vrsqrt.pop %v292
    %v357 = vmul.f32 %v292, %v356
    %vm358 = vcmp.eq.f32.partialorder %v292, inf
    %v359 = vsel %vm358, %v292, %v357
    %vm360 = vcmp.eq.f32.partialorder %v292, 0.0
    %v361 = vand.u32 %v292, 2147483648
    %v362 = vsel %vm360, %v361, %v359
    %v363 = vrsqrt.pop %v294
    %v364 = vmul.f32 %v294, %v363
    %vm365 = vcmp.eq.f32.partialorder %v294, inf
    %v366 = vsel %vm365, %v294, %v364
    %vm367 = vcmp.eq.f32.partialorder %v294, 0.0
    %v368 = vand.u32 %v294, 2147483648
    %v369 = vsel %vm367, %v368, %v366
    %v370 = vrsqrt.pop %v296
    %v371 = vmul.f32 %v296, %v370
    %vm372 = vcmp.eq.f32.partialorder %v296, inf
    %v373 = vsel %vm372, %v296, %v371
    %vm374 = vcmp.eq.f32.partialorder %v296, 0.0
    %v375 = vand.u32 %v296, 2147483648
    %v376 = vsel %vm374, %v375, %v373
    %v377 = vrsqrt.pop %v298
    %v378 = vmul.f32 %v298, %v377
    %vm379 = vcmp.eq.f32.partialorder %v298, inf
    %v380 = vsel %vm379, %v298, %v378
    %vm381 = vcmp.eq.f32.partialorder %v298, 0.0
    %v382 = vand.u32 %v298, 2147483648
    %v383 = vsel %vm381, %v382, %v380
    %v384 = vsub.f32 %v306, %v348
    %v385 = vsub.f32 %v313, %v355
    %v386 = vsub.f32 %v320, %v362
    %v387 = vsub.f32 %v327, %v369
    %v388 = vsub.f32 %v334, %v376
    %v389 = vsub.f32 %v341, %v383
    %v390 = vadd.f32 %v384, 1.0
    %v391 = vadd.f32 %v385, 1.0
    %v392 = vadd.f32 %v386, 1.0
    %v393 = vadd.f32 %v387, 1.0
    %v394 = vadd.f32 %v388, 1.0
    %v395 = vadd.f32 %v389, 1.0
    %v396 = vmax.f32 %v390, 0.0
    %v397 = vmax.f32 %v391, 0.0
    %v398 = vmax.f32 %v392, 0.0
    %v399 = vmax.f32 %v393, 0.0
    %v400 = vmax.f32 %v394, 0.0
    %v401 = vmax.f32 %v395, 0.0
    %v402 = vlaneseq
    %v403 = vshrl.u32 %v402, 7
    %v404 = vadd.s32 %v403, 8
    %v405 = vadd.s32 %v403, 16
    %v406 = vadd.s32 %v403, 24
    %v407 = vadd.s32 %v403, 32
    %v408 = vadd.s32 %v403, 40
    %s409 = smul.u32 0, 48
    %v410 = vstv %s409
    %v411 = vadd.s32 %v403, %v410
    %v412 = vadd.s32 %v404, %v410
    %v413 = vadd.s32 %v405, %v410
    %v414 = vadd.s32 %v406, %v410
    %v415 = vadd.s32 %v407, %v410
    %v416 = vadd.s32 %v408, %v410
    %v417 = vstv %s299
    %vm418 = vcmp.lt.s32.totalorder %v411, %v417
    %vm419 = vcmp.lt.s32.totalorder %v412, %v417
    %vm420 = vcmp.lt.s32.totalorder %v413, %v417
    %vm421 = vcmp.lt.s32.totalorder %v414, %v417
    %vm422 = vcmp.lt.s32.totalorder %v415, %v417
    %vm423 = vcmp.lt.s32.totalorder %v416, %v417
    %v424 = vsel %vm418, 1, 0
    %v425 = vsel %vm419, 1, 0
    %v426 = vsel %vm420, 1, 0
    %v427 = vsel %vm421, 1, 0
    %v428 = vsel %vm422, 1, 0
    %v429 = vsel %vm423, 1, 0
    %v430 = vcvt.s32.f32 %v424
    %v431 = vcvt.s32.f32 %v425
    %v432 = vcvt.s32.f32 %v426
    %v433 = vcvt.s32.f32 %v427
    %v434 = vcvt.s32.f32 %v428
    %v435 = vcvt.s32.f32 %v429
    %v436 = vmul.f32 %v396, %v430
    %v437 = vmul.f32 %v397, %v431
    %v438 = vmul.f32 %v398, %v432
    %v439 = vmul.f32 %v399, %v433
    %v440 = vmul.f32 %v400, %v434
    %v441 = vmul.f32 %v401, %v435
    %v442 = vadd.f32 %v436, %v437
    %v443 = vadd.f32 %v442, %v438
    %v444 = vadd.f32 %v443, %v439
    %v445 = vadd.f32 %v444, %v440
    %v446 = vadd.f32 %v445, %v441
    %v447 = vrot.slane %v446, 4
    %v448 = vadd.f32 %v446, %v447
    %v449 = vrot.slane %v448, 2
    %v450 = vadd.f32 %v448, %v449
    %v451 = vrot.slane %v450, 1
    %v452 = vadd.f32 %v450, %v451
    %v453 = vmul.f32 %v306, %v430
    %v454 = vmul.f32 %v313, %v431
    %v455 = vmul.f32 %v320, %v432
    %v456 = vmul.f32 %v327, %v433
    %v457 = vmul.f32 %v334, %v434
    %v458 = vmul.f32 %v341, %v435
    %v459 = vadd.f32 %v453, %v454
    %v460 = vadd.f32 %v459, %v455
    %v461 = vadd.f32 %v460, %v456
    %v462 = vadd.f32 %v461, %v457
    %v463 = vadd.f32 %v462, %v458
    %v464 = vrot.slane %v463, 4
    %v465 = vadd.f32 %v463, %v464
    %v466 = vrot.slane %v465, 2
    %v467 = vadd.f32 %v465, %v466
    %v468 = vrot.slane %v467, 1
    %v469 = vadd.f32 %v467, %v468
    %v470 = vmul.f32 %v348, %v430
    %v471 = vmul.f32 %v355, %v431
    %v472 = vmul.f32 %v362, %v432
    %v473 = vmul.f32 %v369, %v433
    %v474 = vmul.f32 %v376, %v434
    %v475 = vmul.f32 %v383, %v435
    %v476 = vadd.f32 %v470, %v471
    %v477 = vadd.f32 %v476, %v472
    %v478 = vadd.f32 %v477, %v473
    %v479 = vadd.f32 %v478, %v474
    %v480 = vadd.f32 %v479, %v475
    %v481 = vrot.slane %v480, 4
    %v482 = vadd.f32 %v480, %v481
    %v483 = vrot.slane %v482, 2
    %v484 = vadd.f32 %v482, %v483
    %v485 = vrot.slane %v484, 1
    %v486 = vadd.f32 %v484, %v485
    %vm487 = vcmp.eq.s32.totalorder %v36, 0
    %v488 = vsel %vm487, %v452, 0.0
    %vm489 = vcmp.eq.s32.totalorder %v36, 1
    %v490 = vsel %vm489, %v469, 0.0
    %v491 = vadd.f32 %v488, %v490
    %vm492 = vcmp.eq.s32.totalorder %v36, 2
    %v493 = vsel %vm492, %v486, 0.0
    %v494 = vadd.f32 %v491, %v493
    %495 = vst [vmem:[#allocation4] sm:$0xff] %v494
    // Predicated region
    $region10: #{tpu_custom_call.1} parent=1 // pred_check
      _
    $region11: #{tpu_custom_call.1} parent=1 // pred_check_branch
      %497 = sbr.rel (0) target = $region13
    $region12: #{tpu_custom_call.1} parent=1 // pred_region
      %s499 = ssub.s32 128, 128
      %500 = vsyncadd [#allocation5], %s499
      %s502 = sshll.u32 [#allocation4], 4
      %s503 = int_to_ptr.vmem [resolvable:$true] %s502
      %505 = dma.vmem_to_hbm [thread:$0]  %s503, 128, %s3, [#allocation5]
    $region13: #{tpu_custom_call.1} parent=1 // pred_fallthru
      _
    // Predicated region
    $region14: #{tpu_custom_call.1} parent=1 // pred_check
      _
    $region15: #{tpu_custom_call.1} parent=1 // pred_check_branch
      %507 = sbr.rel (0) target = $region17
    $region16: #{tpu_custom_call.1} parent=1 // pred_region
      %508 = dma.done [#allocation5], 128
    $region17: #{tpu_custom_call.1} parent=1 // pred_fallthru
      _
    %509 = vsyncpa [#allocation5], 1

</llo_original>
